<compile_context>
chip_gen: v5e
topology: v5e:2x2
jax: 0.10.0
libtpu: 0.0.40
codegen_flags: <defaults>
</compile_context>

<pallas_src>
import math
from functools import partial

import jax
import jax.numpy as jnp
from jax.experimental import pallas as pl
from jax.experimental.pallas import tpu as pltpu


def _pos_enc_kernel(x_ref, pe_ref, o_ref, *, batch):
    # x_ref / o_ref : (tS, B*D)    pe_ref : (tS, D)
    # Pure streaming broadcast-add; HBM-bandwidth bound.  pe is replicated
    # `batch` times along the lane axis so out[s, b*D + d] = x[s, b*D+d] + pe[s, d].
    pe = pe_ref[...]
    if batch > 1:
        pe = jnp.concatenate([pe] * batch, axis=-1)  # lane replicate: uses idle slack
    o_ref[...] = x_ref[...] + pe
    # TODO(synk): further HBM-byte reduction for tiny batch: generate pe
    # in-kernel (broadcasted_iota + exp/sin/cos on the idle EUP) and drop the
    # pe input stream entirely.


def make_pe(max_len, d_model, dtype=jnp.float32):
    """Sinusoidal table, identical math to the PyTorch __init__.

    Returns the module-buffer layout (max_len, 1, d_model).  Store it once at
    the model dtype so the wrapper never has to cast it per call.
    (Odd d_model fails exactly as it does in the PyTorch original.)
    """
    position = jnp.arange(max_len, dtype=jnp.float32)[:, None]           # (L, 1)
    div_term = jnp.exp(
        jnp.arange(0, d_model, 2, dtype=jnp.float32)
        * (-math.log(10000.0) / d_model)
    )                                                                    # (D/2,)
    pe = jnp.zeros((max_len, d_model), dtype=jnp.float32)
    pe = pe.at[:, 0::2].set(jnp.sin(position * div_term))
    pe = pe.at[:, 1::2].set(jnp.cos(position * div_term))
    # unsqueeze(0).transpose(0, 1) -> (max_len, 1, d_model)
    return pe[:, None, :].astype(dtype)


def _round_up(x, m):
    return (x + m - 1) // m * m


def _choose_tile_s(S, B, D, itemsize, vmem_budget_bytes):
    """Sequence tile with padded-footprint accounting and a >=8-step grid bias."""
    if S < 8:
        return S                                  # degenerate: one full-extent block
    sub = max(8, 32 // max(1, itemsize))          # sublane pack: 8 f32 / 16 bf16 / 32 i8
    lanes_x = _round_up(B * D, 128)               # lane padding of x / out blocks
    lanes_pe = _round_up(D, 128)                  # lane padding of pe block
    # One grid step, double-buffered (x-in + out + pe), per *padded* row:
    bytes_per_row = 2 * (2 * lanes_x + lanes_pe) * itemsize
    step = sub if S >= sub else 8
    budget_rows = max(step, (vmem_budget_bytes // bytes_per_row) // step * step)
    # Prefer >=8 grid steps over bigger tiles: multi-MiB blocks already sit near
    # the HBM roofline, while pipelining and v7x's 2-TC split need many steps.
    cap_rows = max(step, _round_up(pl.cdiv(S, 8), step))
    return int(min(budget_rows, cap_rows, _round_up(S, step)))


def positional_encoding(x, pe, *, vmem_budget_bytes=16 * 1024 * 1024):
    """Eval-mode forward: x + pe[:S], dropout = identity.

    x : (S, B, D).  pe : (max_len, 1, D) or (max_len, D), ideally stored at the
    model dtype (see make_pe) so no per-call cast is needed.
    NOTE: x's HBM buffer is donated to the output; do not reuse `x` afterwards.
    """
    S, B, D = x.shape
    # Squeeze pe's singleton batch dim -> sublane/lane-dense 2-D (max_len, D).
    pe2d = pe.reshape(pe.shape[0], pe.shape[-1])
    if pe2d.dtype != x.dtype:        # no-op when pe is stored at the model dtype
        pe2d = pe2d.astype(x.dtype)

    itemsize = jnp.dtype(x.dtype).itemsize
    tS = _choose_tile_s(S, B, D, itemsize, vmem_budget_bytes)
    if S < 8:
        # Tiny-sequence path: the pe block's first dim must equal its full array
        # dim, so take a (tiny) slice here.  Normal path reads the full table.
        pe2d = pe2d[:S]

    # Collapse (B, D) into one lane axis: dense sublanes for any B, and a wider
    # B*D lane extent for the output store.  The reshape is a contiguous
    # collapse -> free at the XLA level.
    x2d = x.reshape(S, B * D)
    grid = (pl.cdiv(S, tS),)

    out2d = pl.pallas_call(
        partial(_pos_enc_kernel, batch=B),
        out_shape=jax.ShapeDtypeStruct((S, B * D), x.dtype),
        grid=grid,
        in_specs=[
            # tS is a multiple of 8 (or == S when S < 8); trailing dims equal the
            # full array dims, so the (8, 128) divisibility rule holds for any B, D.
            pl.BlockSpec((tS, B * D), lambda i: (i, 0)),
            pl.BlockSpec((tS, D), lambda i: (i, 0)),
        ],
        out_specs=pl.BlockSpec((tS, B * D), lambda i: (i, 0)),
        # Donate x's buffer to the output (block i is read before it is written back).
        input_output_aliases={0: 0},
        compiler_params=pltpu.CompilerParams(
            # Sequence tiles are independent -> shard across both TCs on v7x;
            # on 1-TC chips (v5e/v6e) this knob is a measured no-op.
            dimension_semantics=("parallel",),
            # >= 32 MiB covers v5e's 16 MiB scoped default; with the default
            # 16 MiB block budget this stays well under v7x's 64 MiB per-TC VMEM.
            vmem_limit_bytes=int(max(32 * 1024 * 1024, 2 * vmem_budget_bytes)),
        ),
    )(x2d, pe2d)

    # TODO(synk): nn.Dropout(p=0.1) is identity in eval mode; training-mode
    # dropout would need pltpu.prng_seed / prng_random_bits inside the kernel.
    return out2d.reshape(S, B, D)


if __name__ == "__main__":
    key = jax.random.PRNGKey(0)
    k1, k2, k3, k4 = jax.random.split(key, 4)
    MAX_LEN = 64  # synthetic small max_len (module default is 5000)

    # --- Test 1: module-like shapes (seq=8, batch=2, d_model=32), f32.
    S, B, D = 8, 2, 32
    x = jax.random.normal(k1, (S, B, D), dtype=jnp.float32)
    pe = make_pe(MAX_LEN, D)
    ref = x + pe[:S]                       # reference BEFORE the aliased call
    out = jax.block_until_ready(positional_encoding(x, pe))
    assert out.shape == (S, B, D)
    assert jnp.allclose(out, ref, atol=1e-6, rtol=1e-6)

    # --- Test 2: multi-tile grid (S=40 -> tS=8, grid=(5,)): pipelined path.
    S2 = 40
    x2 = jax.random.normal(k2, (S2, B, D), dtype=jnp.float32)
    ref2 = x2 + pe[:S2]
    out2 = jax.block_until_ready(positional_encoding(x2, pe))
    assert out2.shape == (S2, B, D)
    assert jnp.allclose(out2, ref2, atol=1e-6, rtol=1e-6)

    # --- Test 3: tiny sequence (S=5 < 8): single full-extent block path.
    S3 = 5
    x3 = jax.random.normal(k3, (S3, B, D), dtype=jnp.float32)
    ref3 = x3 + pe[:S3]
    out3 = jax.block_until_ready(positional_encoding(x3, pe))
    assert out3.shape == (S3, B, D)
    assert jnp.allclose(out3, ref3, atol=1e-6, rtol=1e-6)

    # --- Test 4: bf16 end-to-end (pe stored at the model dtype; no per-call cast).
    S4, D4 = 64, 32
    x4 = jax.random.normal(k4, (S4, B, D4), dtype=jnp.float32).astype(jnp.bfloat16)
    pe4 = make_pe(MAX_LEN, D4, dtype=jnp.bfloat16)
    ref4 = x4 + pe4[:S4]
    out4 = jax.block_until_ready(positional_encoding(x4, pe4))
    assert out4.dtype == jnp.bfloat16
    assert jnp.allclose(out4.astype(jnp.float32), ref4.astype(jnp.float32),
                        atol=1e-2, rtol=1e-2)

    print("KERNEL_OK")
</pallas_src>

<mosaic_0001>
module attributes {stable_mosaic.version = 11 : i64} {
  func.func @_pos_enc_kernel(%arg0: i32, %arg1: memref<8x64xf32, #tpu.memory_space<vmem>>, %arg2: memref<8x32xf32, #tpu.memory_space<vmem>>, %arg3: memref<8x64xf32, #tpu.memory_space<vmem>>) attributes {dimension_semantics = [#tpu.dimension_semantics<parallel>], iteration_bounds = array<i64: 1>, scalar_prefetch = 0 : i64, scratch_operands = 0 : i64, tpu.core_type = #tpu.core_type<tc>, window_params = [{transform_indices = @transform_0, window_bounds = array<i64: 8, 64>}, {transform_indices = @transform_1, window_bounds = array<i64: 8, 32>}, {transform_indices = @transform_2, window_bounds = array<i64: 8, 64>}]} {
    %c0 = arith.constant 0 : index
    %c0_0 = arith.constant 0 : index
    %0 = vector.load %arg2[%c0, %c0_0] : memref<8x32xf32, #tpu.memory_space<vmem>>, vector<8x32xf32>
    %1 = tpu.concatenate %0, %0 in 1 : vector<8x32xf32>, vector<8x32xf32> -> vector<8x64xf32>
    %c0_1 = arith.constant 0 : index
    %c0_2 = arith.constant 0 : index
    %2 = vector.load %arg1[%c0_1, %c0_2] : memref<8x64xf32, #tpu.memory_space<vmem>>, vector<8x64xf32>
    %3 = arith.addf %2, %1 : vector<8x64xf32>
    %c0_3 = arith.constant 0 : index
    %c0_4 = arith.constant 0 : index
    %4 = vector.load %arg3[%c0_3, %c0_4] : memref<8x64xf32, #tpu.memory_space<vmem>>, vector<8x64xf32>
    tpu.vector_store %arg3[%c0_3, %c0_4], %3 {strides = array<i32>} : memref<8x64xf32, #tpu.memory_space<vmem>>, vector<8x64xf32>,
    return
  }
  func.func @transform_0(%arg0: i32) -> (i32, i32) {
    %c0_i32 = arith.constant 0 : i32
    %c0_i32_0 = arith.constant 0 : i32
    return %arg0, %c0_i32 : i32, i32
  }
  func.func @transform_1(%arg0: i32) -> (i32, i32) {
    %c0_i32 = arith.constant 0 : i32
    %c0_i32_0 = arith.constant 0 : i32
    return %arg0, %c0_i32 : i32, i32
  }
  func.func @transform_2(%arg0: i32) -> (i32, i32) {
    %c0_i32 = arith.constant 0 : i32
    %c0_i32_0 = arith.constant 0 : i32
    return %arg0, %c0_i32 : i32, i32
  }
}

</mosaic_0001>

<llo_original>
// kernel: tpu_custom_call.1
$region0: #{tpu_custom_call.1}
  #allocation0 [shape = 'u32[]', space=smem, size = 0x4, offset = 0x4, fixed_abs, tag = 'smem constant byte address 0x4 - core index']
  #allocation1 [shape = 'u32[72,128]{1,0:T(1,128)}', space=vmem, size = 0x9000, scoped, tag = 'internal scratch']
  %s0 = inlined_call_operand.hbm [shape: f32[8,64], index: 0, kind: input, shape index: {}, may-alias: {0,2}]
  %s1 = inlined_call_operand.vmem [shape: f32[64,32], index: 1, kind: input, shape index: {}]
  %s2 = inlined_call_operand.hbm [shape: f32[8,64], index: 2, kind: output, shape index: {}, may-alias: {0,2}]
  %s3 = sld [smem:[#allocation0]]
  $region22: #{tpu_custom_call.1} parent=0
    _
  %s5 = ssub.s32 1, %s3
  %s6 = scalar_select 0, %s5, %s3
  $region1: #{tpu_custom_call.1} parent=0
    #allocation2 [shape = 'u8[4096]{0}', space=vmem, size = 0x1000, scoped, tag = 'input window, operand 0, single buffered']
    #allocation3 [shape = 's32[1]{0}', space=sflag, size = 0x4, scoped, tag = 'scoped memory for tpu_custom_call.1']
    #allocation4 [shape = 's32[1]{0}', space=sflag, size = 0x4, scoped, tag = 'scoped memory for tpu_custom_call.1']
    #allocation5 [shape = 'u8[4096]{0}', space=vmem, size = 0x1000, scoped, tag = 'output window, operand 0, single buffered']
    %7 = vsyncpa [#allocation3], 0
    %8 = vsyncpa [#allocation4], 0
    // Predicated region
    $region2: #{tpu_custom_call.1} parent=1 // pred_check
      _
    $region3: #{tpu_custom_call.1} parent=1 // pred_check_branch
      %10 = sbr.rel (0) target = $region5
    $region4: #{tpu_custom_call.1} parent=1 // pred_region
      %12 = vsyncadd [#allocation3], 0
      %s14 = sshll.u32 %s0, 4
      %s15 = int_to_ptr.hbm [resolvable:$true] %s14
      %s16 = sshll.u32 [#allocation2], 4
      %s17 = int_to_ptr.vmem [resolvable:$true] %s16
      %19 = dma.hbm_to_vmem [thread:$0]  %s15, 128, %s17, [#allocation3]
    $region5: #{tpu_custom_call.1} parent=1 // pred_fallthru
      _
    // Predicated region
    $region6: #{tpu_custom_call.1} parent=1 // pred_check
      _
    $region7: #{tpu_custom_call.1} parent=1 // pred_check_branch
      %21 = sbr.rel (0) target = $region9
    $region8: #{tpu_custom_call.1} parent=1 // pred_region
      _
    $region9: #{tpu_custom_call.1} parent=1 // pred_fallthru
      _
    // Predicated region
    $region10: #{tpu_custom_call.1} parent=1 // pred_check
      _
    $region11: #{tpu_custom_call.1} parent=1 // pred_check_branch
      %23 = sbr.rel (0) target = $region13
    $region12: #{tpu_custom_call.1} parent=1 // pred_region
      %25 = dma.done [#allocation3], 128
    $region13: #{tpu_custom_call.1} parent=1 // pred_fallthru
      _
    %v26 = vld [vmem:[%s1] sm:$0xff]
    %28 = vrot.lane.b32.xlu0 %v26, 32
    %v29 = vpop.permute.xlu0 %28
    %vm31 = vcmask 261120
    %v32 = vsel %vm31, %v26, %v29
    %v33 = vld [vmem:[#allocation2] sm:$0xff]
    %v34 = vadd.f32 %v33, %v32
    %vm35 = vcmask 523264
    %36 = vst.msk [vmem:[#allocation5] sm:$0xff] %vm35, %v34
    // Predicated region
    $region14: #{tpu_custom_call.1} parent=1 // pred_check
      _
    $region15: #{tpu_custom_call.1} parent=1 // pred_check_branch
      %38 = sbr.rel (0) target = $region17
    $region16: #{tpu_custom_call.1} parent=1 // pred_region
      %40 = vsyncadd [#allocation4], 0
      %s42 = sshll.u32 [#allocation5], 4
      %s43 = int_to_ptr.vmem [resolvable:$true] %s42
      %s44 = sshll.u32 %s2, 4
      %s45 = int_to_ptr.hbm [resolvable:$true] %s44
      %47 = dma.vmem_to_hbm [thread:$0]  %s43, 128, %s45, [#allocation4]
    $region17: #{tpu_custom_call.1} parent=1 // pred_fallthru
      _
    // Predicated region
    $region18: #{tpu_custom_call.1} parent=1 // pred_check
      _
    $region19: #{tpu_custom_call.1} parent=1 // pred_check_branch
      %49 = sbr.rel (0) target = $region21
    $region20: #{tpu_custom_call.1} parent=1 // pred_region
      %51 = dma.done [#allocation4], 128
    $region21: #{tpu_custom_call.1} parent=1 // pred_fallthru
      _
    %52 = vsyncpa [#allocation3], 1
    %53 = vsyncpa [#allocation4], 1

</llo_original>
